<compile_context>
chip_gen: v7x
topology: tpu7x:2x2x1
jax: 0.10.0
libtpu: 0.0.40
codegen_flags: <defaults>
</compile_context>

<pallas_src>
import functools

import jax
import jax.numpy as jnp
from jax.experimental import pallas as pl
from jax.experimental.pallas import tpu as pltpu


def _round_up(x, m):
    return ((x + m - 1) // m) * m


def _ro_dense_kernel(x_ref, wT_ref, omc_ref, nopc_ref, o_ref,
                     y_ref, prevx_ref, prevvm_ref, *, vth):
    # x_ref:    (TT, TB, IN_pad)   time-major input block, matmul dtype (bf16)
    # wT_ref:   (IN_pad, TO)       transposed weight tile, matmul dtype
    # omc_ref:  (1, TO)            1 - const            (precomputed, f32)
    # nopc_ref: (1, TO)            -1 / (1 + const)     (precomputed, f32)
    # o_ref:    (TT, TB, TO)       spike block (time-major), store dtype (bf16)
    # y_ref:    (TT*TB, TO) f32    scratch holding the hoisted GEMM result
    # prevx_ref / prevvm_ref: (TB, TO) f32 state carried across time tiles
    tt, tb, in_dim = x_ref.shape
    to = o_ref.shape[-1]

    # Reset oscillator state at the first time tile of every (batch, out) tile.
    @pl.when(pl.program_id(2) == 0)
    def _init():
        prevx_ref[...] = jnp.zeros_like(prevx_ref)
        prevvm_ref[...] = jnp.zeros_like(prevvm_ref)

    # Hoisted Linear: ONE MXU matmul for the whole (TT*TB, IN) block, straight
    # into VMEM scratch (keeps vreg pressure independent of TT).
    x2d = x_ref[...].reshape(tt * tb, in_dim)
    y_ref[...] = jnp.dot(x2d, wT_ref[...], preferred_element_type=jnp.float32)

    # Hoisted broadcasts (JAX does not CSE broadcast_in_dim inside the loop).
    omc = jnp.broadcast_to(omc_ref[...], (tb, to))
    nopc = jnp.broadcast_to(nopc_ref[...], (tb, to))

    prev_x = prevx_ref[...]
    prev_vm = prevvm_ref[...]
    # Fully-unrolled recurrence; every slice/store below is a contiguous,
    # 8-aligned (TB, TO) plane -> lane-dense loads and stores.
    for t in range(tt):
        y_t = y_ref[pl.ds(t * tb, tb), :]                 # (TB, TO) f32
        vm = (prev_vm * omc + y_t + prev_x) * nopc
        # TODO(synk): utils.ThresholdBelow is a custom autograd Function; only its
        # forward (spike = 1 where vm < vth) is implemented here, no surrogate grad.
        spiked = vm < vth
        o_ref[t] = jnp.where(spiked, 1.0, 0.0).astype(o_ref.dtype)
        prev_x = jnp.where(spiked, 0.0, y_t)
        prev_vm = jnp.where(spiked, 0.0, vm)

    prevx_ref[...] = prev_x
    prevvm_ref[...] = prev_vm


def ro_dense_forward(x, weight, *, kvco, ffree, vth,
                     batch_tile=None, time_tile=None, out_tile=None,
                     matmul_dtype=jnp.bfloat16, out_dtype=jnp.bfloat16):
    """RO_Dense forward.

    x:      (B, T, IN)  float32
    weight: (OUT, IN)   float32 (torch.nn.Linear weight, no bias)
    returns spikes (B, T, OUT) in out_dtype (values are exactly 0.0 / 1.0)
    """
    B, T, IN = x.shape
    OUT = weight.shape[0]
    base_const = float(ffree) / float(kvco)

    # Per-output-neuron constants, computed host-side from the f32 weight
    # (time-invariant -> the per-step divide becomes a reciprocal multiply and
    # the leading negate is folded into nopc).
    weight = weight.astype(jnp.float32)
    const = base_const * (1.0 + jnp.sum(jnp.abs(weight), axis=1))         # (OUT,)
    omc = (1.0 - const).astype(jnp.float32)
    nopc = (-1.0 / (1.0 + const)).astype(jnp.float32)

    # ---- tiling -------------------------------------------------------------
    TB = 8 if batch_tile is None else max(8, (int(batch_tile) // 8) * 8)
    if time_tile is None:
        TT = T if T <= 32 else 32          # TB*TT = 256 saturates the v6e/v7x MXU
    else:
        TT = max(1, min(int(time_tile), T))
    B_pad = _round_up(B, TB)
    T_pad = _round_up(T, TT)

    OUT_pad0 = _round_up(OUT, 128)         # lane-dense spike stores
    if out_tile is not None:
        TO = _round_up(max(128, min(int(out_tile), OUT_pad0)), 128)
        OUT_pad = _round_up(OUT, TO)
    elif OUT_pad0 <= 512:
        TO, OUT_pad = OUT_pad0, OUT_pad0
    else:
        TO = next(d for d in (512, 384, 256, 128) if OUT_pad0 % d == 0)
        OUT_pad = OUT_pad0

    # Pad IN to a lane multiple only when it is already large (for small IN the
    # full-dim block is legal and padding would inflate x HBM traffic).
    IN_pad = IN if (IN <= 128 or IN % 128 == 0) else _round_up(IN, 128)

    # ---- layout / padding (time-major; padded rows/steps/lanes are sliced off)
    x_tm = jnp.transpose(x, (1, 0, 2))                                     # (T, B, IN)
    if (T_pad, B_pad, IN_pad) != (T, B, IN):
        x_tm = jnp.pad(x_tm, ((0, T_pad - T), (0, B_pad - B), (0, IN_pad - IN)))
    x_tm = x_tm.astype(matmul_dtype)       # cast in the wrapper: halves x HBM traffic

    wT = jnp.transpose(weight)                                             # (IN, OUT)
    if (IN_pad, OUT_pad) != (IN, OUT):
        wT = jnp.pad(wT, ((0, IN_pad - IN), (0, OUT_pad - OUT)))
        omc = jnp.pad(omc, (0, OUT_pad - OUT))
        nopc = jnp.pad(nopc, (0, OUT_pad - OUT))
    wT = wT.astype(matmul_dtype)
    omc = omc.reshape(1, OUT_pad)
    nopc = nopc.reshape(1, OUT_pad)

    nb, no, nt = B_pad // TB, OUT_pad // TO, T_pad // TT

    # ---- VMEM budget (explicit: v5e default scoped limit is only 16 MiB) ----
    mm_sz = jnp.dtype(matmul_dtype).itemsize
    st_sz = jnp.dtype(out_dtype).itemsize
    est_vmem = (2 * TT * TB * IN_pad * mm_sz      # x blocks (double-buffered)
                + 2 * IN_pad * TO * mm_sz         # weight tile (double-buffered even though constant)
                + 4 * TO * 4                      # omc / nopc tiles
                + 2 * TT * TB * TO * st_sz        # out blocks (double-buffered)
                + TT * TB * TO * 4                # y scratch
                + 2 * TB * TO * 4)                # prev_x / prev_vm scratch
    vmem_limit = int(min(max(2 * est_vmem, 8 << 20), 64 << 20))  # fits v7x's 64 MiB

    kernel = functools.partial(_ro_dense_kernel, vth=float(vth))

    spikes_tm = pl.pallas_call(
        kernel,
        out_shape=jax.ShapeDtypeStruct((T_pad, B_pad, OUT_pad), out_dtype),
        grid_spec=pltpu.PrefetchScalarGridSpec(
            num_scalar_prefetch=0,
            grid=(nb, no, nt),
            in_specs=[
                pl.BlockSpec((TT, TB, IN_pad), lambda b, o, t: (t, b, 0)),  # x (time-major)
                pl.BlockSpec((IN_pad, TO), lambda b, o, t: (0, o)),         # W^T tile
                pl.BlockSpec((1, TO), lambda b, o, t: (0, o)),              # 1 - const
                pl.BlockSpec((1, TO), lambda b, o, t: (0, o)),              # -1/(1+const)
            ],
            out_specs=pl.BlockSpec((TT, TB, TO), lambda b, o, t: (t, b, o)),
            scratch_shapes=[
                pltpu.VMEM((TT * TB, TO), jnp.float32),   # y (hoisted GEMM result)
                pltpu.VMEM((TB, TO), jnp.float32),        # prev_x across time tiles
                pltpu.VMEM((TB, TO), jnp.float32),        # prev_vm across time tiles
            ],
        ),
        compiler_params=pltpu.CompilerParams(
            # batch tiles and OUT tiles are fully independent (megacore on v7x);
            # time tiles carry state in scratch -> must run sequentially.
            dimension_semantics=("parallel", "parallel", "arbitrary"),
            vmem_limit_bytes=vmem_limit),
        # NOTE: for very large IN*OUT the resident weight tile could instead stay
        # in HBM (memory_space=pl.ANY) and be DMA'd once into scratch; with OUT
        # tiling the double-buffered tile already fits the budget above.
    )(x_tm, wT, omc, nopc)

    spikes = jnp.transpose(spikes_tm[:T, :B, :OUT], (1, 0, 2))
    return spikes.astype(out_dtype)


def _ro_dense_reference(x, weight, *, kvco, ffree, vth, matmul_dtype=jnp.bfloat16):
    """Pure-JAX reference mirroring the PyTorch module (same bf16 GEMM rounding)."""
    B, T, IN = x.shape
    OUT = weight.shape[0]
    weight = weight.astype(jnp.float32)
    const = (float(ffree) / float(kvco)) * (1.0 + jnp.sum(jnp.abs(weight), axis=1))
    omc = (1.0 - const).astype(jnp.float32)
    nopc = (-1.0 / (1.0 + const)).astype(jnp.float32)
    y = jnp.dot(x.reshape(B * T, IN).astype(matmul_dtype),
                jnp.transpose(weight).astype(matmul_dtype),
                preferred_element_type=jnp.float32).reshape(B, T, OUT)
    prev_x = jnp.zeros((B, OUT), jnp.float32)
    prev_vm = jnp.zeros((B, OUT), jnp.float32)
    outs = []
    for t in range(T):
        y_t = y[:, t, :]
        vm = (prev_vm * omc + y_t + prev_x) * nopc
        spk = (vm < vth).astype(jnp.float32)
        outs.append(spk)
        prev_x = y_t * (1.0 - spk)
        prev_vm = vm * (1.0 - spk)
    return jnp.stack(outs, axis=1)


if __name__ == "__main__":
    # Small shapes consistent with the module: batch=2, timesteps=8,
    # in_neurons=32, out_neurons=32.
    B, T, IN, OUT = 2, 8, 32, 32
    kvco, ffree, vth = 2.0, 1.0, -0.1
    std_gain = 1.0  # std_gain=None path: leave weights as initialized

    key = jax.random.PRNGKey(0)
    kx, kw = jax.random.split(key)

    # Deterministic synthetic parameters mirroring torch.nn.Linear init:
    # uniform(-1/sqrt(in_neurons), 1/sqrt(in_neurons)), optional std_gain scale.
    bound = 1.0 / (IN ** 0.5)
    weight = jax.random.uniform(kw, (OUT, IN), jnp.float32,
                                minval=-bound, maxval=bound) * std_gain
    x = jax.random.normal(kx, (B, T, IN), jnp.float32)

    spikes = ro_dense_forward(x, weight, kvco=kvco, ffree=ffree, vth=vth)
    spikes = jax.block_until_ready(spikes)
    assert spikes.shape == (B, T, OUT)

    spikes_f32 = spikes.astype(jnp.float32)
    assert bool(jnp.all((spikes_f32 == 0.0) | (spikes_f32 == 1.0)))

    ref = _ro_dense_reference(x, weight, kvco=kvco, ffree=ffree, vth=vth)
    assert bool(jnp.all(spikes_f32 == ref)), "kernel spikes mismatch pure-JAX reference"

    print("KERNEL_OK")
</pallas_src>

<mosaic_0001>
module attributes {stable_mosaic.version = 11 : i64} {
  func.func @_ro_dense_kernel(%arg0: i32, %arg1: i32, %arg2: i32, %arg3: memref<8x8x32xbf16, #tpu.memory_space<vmem>>, %arg4: memref<32x128xbf16, #tpu.memory_space<vmem>>, %arg5: memref<1x128xf32, #tpu.memory_space<vmem>>, %arg6: memref<1x128xf32, #tpu.memory_space<vmem>>, %arg7: memref<8x8x128xbf16, #tpu.memory_space<vmem>>, %arg8: memref<64x128xf32, #tpu.memory_space<vmem>>, %arg9: memref<8x128xf32, #tpu.memory_space<vmem>>, %arg10: memref<8x128xf32, #tpu.memory_space<vmem>>) attributes {dimension_semantics = [#tpu.dimension_semantics<parallel>, #tpu.dimension_semantics<parallel>, #tpu.dimension_semantics<arbitrary>], iteration_bounds = array<i64: 1, 1, 1>, scalar_prefetch = 0 : i64, scratch_operands = 3 : i64, tpu.core_type = #tpu.core_type<tc>, window_params = [{transform_indices = @transform_0, window_bounds = array<i64: 8, 8, 32>}, {transform_indices = @transform_1, window_bounds = array<i64: 32, 128>}, {transform_indices = @transform_2, window_bounds = array<i64: 1, 128>}, {transform_indices = @transform_3, window_bounds = array<i64: 1, 128>}, {transform_indices = @transform_4, window_bounds = array<i64: 8, 8, 128>}]} {
    %c0_i32 = arith.constant 0 : i32
    %0 = arith.cmpi eq, %arg2, %c0_i32 : i32
    %1 = arith.extui %0 : i1 to i32
    %c0_i32_0 = arith.constant 0 : i32
    %2 = arith.cmpi ne, %1, %c0_i32_0 : i32
    scf.if %2 {
      %cst_85 = arith.constant 0.000000e+00 : f32
      %162 = vector.broadcast %cst_85 : f32 to vector<8x128xf32>
      %c0_86 = arith.constant 0 : index
      %c0_87 = arith.constant 0 : index
      %163 = vector.load %arg9[%c0_86, %c0_87] : memref<8x128xf32, #tpu.memory_space<vmem>>, vector<8x128xf32>
      tpu.vector_store %arg9[%c0_86, %c0_87], %162 {strides = array<i32>} : memref<8x128xf32, #tpu.memory_space<vmem>>, vector<8x128xf32>,
      %cst_88 = arith.constant 0.000000e+00 : f32
      %164 = vector.broadcast %cst_88 : f32 to vector<8x128xf32>
      %c0_89 = arith.constant 0 : index
      %c0_90 = arith.constant 0 : index
      %165 = vector.load %arg10[%c0_89, %c0_90] : memref<8x128xf32, #tpu.memory_space<vmem>>, vector<8x128xf32>
      tpu.vector_store %arg10[%c0_89, %c0_90], %164 {strides = array<i32>} : memref<8x128xf32, #tpu.memory_space<vmem>>, vector<8x128xf32>,
    } else {
    }
    %c0 = arith.constant 0 : index
    %c0_1 = arith.constant 0 : index
    %c0_2 = arith.constant 0 : index
    %3 = vector.load %arg3[%c0, %c0_1, %c0_2] : memref<8x8x32xbf16, #tpu.memory_space<vmem>>, vector<8x8x32xbf16>
    %4 = vector.shape_cast %3 : vector<8x8x32xbf16> to vector<64x32xbf16>
    %c0_3 = arith.constant 0 : index
    %c0_4 = arith.constant 0 : index
    %5 = vector.load %arg4[%c0_3, %c0_4] : memref<32x128xbf16, #tpu.memory_space<vmem>>, vector<32x128xbf16>
    %cst = arith.constant dense<0.000000e+00> : vector<64x128xf32>
    %6 = tpu.matmul %4, %5, %cst {dimension_numbers = #tpu.dot_dimension_numbers<[1], [0], [0], [1], [0, 0, 1, 1], [], []>} : vector<64x32xbf16>, vector<32x128xbf16>, vector<64x128xf32> -> vector<64x128xf32>
    %c0_5 = arith.constant 0 : index
    %c0_6 = arith.constant 0 : index
    %7 = vector.load %arg8[%c0_5, %c0_6] : memref<64x128xf32, #tpu.memory_space<vmem>>, vector<64x128xf32>
    tpu.vector_store %arg8[%c0_5, %c0_6], %6 {strides = array<i32>} : memref<64x128xf32, #tpu.memory_space<vmem>>, vector<64x128xf32>,
    %c0_7 = arith.constant 0 : index
    %c0_8 = arith.constant 0 : index
    %8 = vector.load %arg5[%c0_7, %c0_8] : memref<1x128xf32, #tpu.memory_space<vmem>>, vector<1x128xf32>
    %9 = vector.shape_cast %8 : vector<1x128xf32> to vector<1x128xf32>
    %10 = vector.broadcast %9 : vector<1x128xf32> to vector<8x128xf32>
    %c0_9 = arith.constant 0 : index
    %c0_10 = arith.constant 0 : index
    %11 = vector.load %arg6[%c0_9, %c0_10] : memref<1x128xf32, #tpu.memory_space<vmem>>, vector<1x128xf32>
    %12 = vector.shape_cast %11 : vector<1x128xf32> to vector<1x128xf32>
    %13 = vector.broadcast %12 : vector<1x128xf32> to vector<8x128xf32>
    %c0_11 = arith.constant 0 : index
    %c0_12 = arith.constant 0 : index
    %14 = vector.load %arg9[%c0_11, %c0_12] : memref<8x128xf32, #tpu.memory_space<vmem>>, vector<8x128xf32>
    %c0_13 = arith.constant 0 : index
    %c0_14 = arith.constant 0 : index
    %15 = vector.load %arg10[%c0_13, %c0_14] : memref<8x128xf32, #tpu.memory_space<vmem>>, vector<8x128xf32>
    %c0_15 = arith.constant 0 : index
    %c0_16 = arith.constant 0 : index
    %16 = vector.load %arg8[%c0_15, %c0_16] : memref<64x128xf32, #tpu.memory_space<vmem>>, vector<8x128xf32>
    %17 = arith.mulf %15, %10 : vector<8x128xf32>
    %18 = arith.addf %17, %16 : vector<8x128xf32>
    %19 = arith.addf %18, %14 : vector<8x128xf32>
    %20 = arith.mulf %19, %13 : vector<8x128xf32>
    %cst_17 = arith.constant -1.000000e-01 : f32
    %21 = vector.broadcast %cst_17 : f32 to vector<8x128xf32>
    %22 = arith.cmpf olt, %20, %21 : vector<8x128xf32>
    %cst_18 = arith.constant 1.000000e+00 : f32
    %cst_19 = arith.constant 0.000000e+00 : f32
    %23 = vector.broadcast %cst_18 : f32 to vector<8x128xf32>
    %24 = vector.broadcast %cst_19 : f32 to vector<8x128xf32>
    %25 = arith.select %22, %23, %24 : vector<8x128xi1>, vector<8x128xf32>
    %26 = arith.truncf %25 : vector<8x128xf32> to vector<8x128xbf16>
    %c0_20 = arith.constant 0 : index
    %c0_21 = arith.constant 0 : index
    %c0_22 = arith.constant 0 : index
    %27 = vector.load %arg7[%c0_20, %c0_21, %c0_22] : memref<8x8x128xbf16, #tpu.memory_space<vmem>>, vector<1x8x128xbf16>
    %28 = vector.shape_cast %27 : vector<1x8x128xbf16> to vector<8x128xbf16>
    %29 = vector.shape_cast %26 : vector<8x128xbf16> to vector<1x8x128xbf16>
    tpu.vector_store %arg7[%c0_20, %c0_21, %c0_22], %29 {strides = array<i32>} : memref<8x8x128xbf16, #tpu.memory_space<vmem>>, vector<1x8x128xbf16>,
    %cst_23 = arith.constant 0.000000e+00 : f32
    %30 = vector.broadcast %cst_23 : f32 to vector<8x128xf32>
    %31 = arith.select %22, %30, %16 : vector<8x128xi1>, vector<8x128xf32>
    %cst_24 = arith.constant 0.000000e+00 : f32
    %32 = vector.broadcast %cst_24 : f32 to vector<8x128xf32>
    %33 = arith.select %22, %32, %20 : vector<8x128xi1>, vector<8x128xf32>
    %c8 = arith.constant 8 : index
    %c0_25 = arith.constant 0 : index
    %34 = vector.load %arg8[%c8, %c0_25] : memref<64x128xf32, #tpu.memory_space<vmem>>, vector<8x128xf32>
    %35 = arith.mulf %33, %10 : vector<8x128xf32>
    %36 = arith.addf %35, %34 : vector<8x128xf32>
    %37 = arith.addf %36, %31 : vector<8x128xf32>
    %38 = arith.mulf %37, %13 : vector<8x128xf32>
    %cst_26 = arith.constant -1.000000e-01 : f32
    %39 = vector.broadcast %cst_26 : f32 to vector<8x128xf32>
    %40 = arith.cmpf olt, %38, %39 : vector<8x128xf32>
    %cst_27 = arith.constant 1.000000e+00 : f32
    %cst_28 = arith.constant 0.000000e+00 : f32
    %41 = vector.broadcast %cst_27 : f32 to vector<8x128xf32>
    %42 = vector.broadcast %cst_28 : f32 to vector<8x128xf32>
    %43 = arith.select %40, %41, %42 : vector<8x128xi1>, vector<8x128xf32>
    %44 = arith.truncf %43 : vector<8x128xf32> to vector<8x128xbf16>
    %c1 = arith.constant 1 : index
    %c0_29 = arith.constant 0 : index
    %c0_30 = arith.constant 0 : index
    %45 = vector.load %arg7[%c1, %c0_29, %c0_30] : memref<8x8x128xbf16, #tpu.memory_space<vmem>>, vector<1x8x128xbf16>
    %46 = vector.shape_cast %45 : vector<1x8x128xbf16> to vector<8x128xbf16>
    %47 = vector.shape_cast %44 : vector<8x128xbf16> to vector<1x8x128xbf16>
    tpu.vector_store %arg7[%c1, %c0_29, %c0_30], %47 {strides = array<i32>} : memref<8x8x128xbf16, #tpu.memory_space<vmem>>, vector<1x8x128xbf16>,
    %cst_31 = arith.constant 0.000000e+00 : f32
    %48 = vector.broadcast %cst_31 : f32 to vector<8x128xf32>
    %49 = arith.select %40, %48, %34 : vector<8x128xi1>, vector<8x128xf32>
    %cst_32 = arith.constant 0.000000e+00 : f32
    %50 = vector.broadcast %cst_32 : f32 to vector<8x128xf32>
    %51 = arith.select %40, %50, %38 : vector<8x128xi1>, vector<8x128xf32>
    %c16 = arith.constant 16 : index
    %c0_33 = arith.constant 0 : index
    %52 = vector.load %arg8[%c16, %c0_33] : memref<64x128xf32, #tpu.memory_space<vmem>>, vector<8x128xf32>
    %53 = arith.mulf %51, %10 : vector<8x128xf32>
    %54 = arith.addf %53, %52 : vector<8x128xf32>
    %55 = arith.addf %54, %49 : vector<8x128xf32>
    %56 = arith.mulf %55, %13 : vector<8x128xf32>
    %cst_34 = arith.constant -1.000000e-01 : f32
    %57 = vector.broadcast %cst_34 : f32 to vector<8x128xf32>
    %58 = arith.cmpf olt, %56, %57 : vector<8x128xf32>
    %cst_35 = arith.constant 1.000000e+00 : f32
    %cst_36 = arith.constant 0.000000e+00 : f32
    %59 = vector.broadcast %cst_35 : f32 to vector<8x128xf32>
    %60 = vector.broadcast %cst_36 : f32 to vector<8x128xf32>
    %61 = arith.select %58, %59, %60 : vector<8x128xi1>, vector<8x128xf32>
    %62 = arith.truncf %61 : vector<8x128xf32> to vector<8x128xbf16>
    %c2 = arith.constant 2 : index
    %c0_37 = arith.constant 0 : index
    %c0_38 = arith.constant 0 : index
    %63 = vector.load %arg7[%c2, %c0_37, %c0_38] : memref<8x8x128xbf16, #tpu.memory_space<vmem>>, vector<1x8x128xbf16>
    %64 = vector.shape_cast %63 : vector<1x8x128xbf16> to vector<8x128xbf16>
    %65 = vector.shape_cast %62 : vector<8x128xbf16> to vector<1x8x128xbf16>
    tpu.vector_store %arg7[%c2, %c0_37, %c0_38], %65 {strides = array<i32>} : memref<8x8x128xbf16, #tpu.memory_space<vmem>>, vector<1x8x128xbf16>,
    %cst_39 = arith.constant 0.000000e+00 : f32
    %66 = vector.broadcast %cst_39 : f32 to vector<8x128xf32>
    %67 = arith.select %58, %66, %52 : vector<8x128xi1>, vector<8x128xf32>
    %cst_40 = arith.constant 0.000000e+00 : f32
    %68 = vector.broadcast %cst_40 : f32 to vector<8x128xf32>
    %69 = arith.select %58, %68, %56 : vector<8x128xi1>, vector<8x128xf32>
    %c24 = arith.constant 24 : index
    %c0_41 = arith.constant 0 : index
    %70 = vector.load %arg8[%c24, %c0_41] : memref<64x128xf32, #tpu.memory_space<vmem>>, vector<8x128xf32>
    %71 = arith.mulf %69, %10 : vector<8x128xf32>
    %72 = arith.addf %71, %70 : vector<8x128xf32>
    %73 = arith.addf %72, %67 : vector<8x128xf32>
    %74 = arith.mulf %73, %13 : vector<8x128xf32>
    %cst_42 = arith.constant -1.000000e-01 : f32
    %75 = vector.broadcast %cst_42 : f32 to vector<8x128xf32>
    %76 = arith.cmpf olt, %74, %75 : vector<8x128xf32>
    %cst_43 = arith.constant 1.000000e+00 : f32
    %cst_44 = arith.constant 0.000000e+00 : f32
    %77 = vector.broadcast %cst_43 : f32 to vector<8x128xf32>
    %78 = vector.broadcast %cst_44 : f32 to vector<8x128xf32>
    %79 = arith.select %76, %77, %78 : vector<8x128xi1>, vector<8x128xf32>
    %80 = arith.truncf %79 : vector<8x128xf32> to vector<8x128xbf16>
    %c3 = arith.constant 3 : index
    %c0_45 = arith.constant 0 : index
    %c0_46 = arith.constant 0 : index
    %81 = vector.load %arg7[%c3, %c0_45, %c0_46] : memref<8x8x128xbf16, #tpu.memory_space<vmem>>, vector<1x8x128xbf16>
    %82 = vector.shape_cast %81 : vector<1x8x128xbf16> to vector<8x128xbf16>
    %83 = vector.shape_cast %80 : vector<8x128xbf16> to vector<1x8x128xbf16>
    tpu.vector_store %arg7[%c3, %c0_45, %c0_46], %83 {strides = array<i32>} : memref<8x8x128xbf16, #tpu.memory_space<vmem>>, vector<1x8x128xbf16>,
    %cst_47 = arith.constant 0.000000e+00 : f32
    %84 = vector.broadcast %cst_47 : f32 to vector<8x128xf32>
    %85 = arith.select %76, %84, %70 : vector<8x128xi1>, vector<8x128xf32>
    %cst_48 = arith.constant 0.000000e+00 : f32
    %86 = vector.broadcast %cst_48 : f32 to vector<8x128xf32>
    %87 = arith.select %76, %86, %74 : vector<8x128xi1>, vector<8x128xf32>
    %c32 = arith.constant 32 : index
    %c0_49 = arith.constant 0 : index
    %88 = vector.load %arg8[%c32, %c0_49] : memref<64x128xf32, #tpu.memory_space<vmem>>, vector<8x128xf32>
    %89 = arith.mulf %87, %10 : vector<8x128xf32>
    %90 = arith.addf %89, %88 : vector<8x128xf32>
    %91 = arith.addf %90, %85 : vector<8x128xf32>
    %92 = arith.mulf %91, %13 : vector<8x128xf32>
    %cst_50 = arith.constant -1.000000e-01 : f32
    %93 = vector.broadcast %cst_50 : f32 to vector<8x128xf32>
    %94 = arith.cmpf olt, %92, %93 : vector<8x128xf32>
    %cst_51 = arith.constant 1.000000e+00 : f32
    %cst_52 = arith.constant 0.000000e+00 : f32
    %95 = vector.broadcast %cst_51 : f32 to vector<8x128xf32>
    %96 = vector.broadcast %cst_52 : f32 to vector<8x128xf32>
    %97 = arith.select %94, %95, %96 : vector<8x128xi1>, vector<8x128xf32>
    %98 = arith.truncf %97 : vector<8x128xf32> to vector<8x128xbf16>
    %c4 = arith.constant 4 : index
    %c0_53 = arith.constant 0 : index
    %c0_54 = arith.constant 0 : index
    %99 = vector.load %arg7[%c4, %c0_53, %c0_54] : memref<8x8x128xbf16, #tpu.memory_space<vmem>>, vector<1x8x128xbf16>
    %100 = vector.shape_cast %99 : vector<1x8x128xbf16> to vector<8x128xbf16>
    %101 = vector.shape_cast %98 : vector<8x128xbf16> to vector<1x8x128xbf16>
    tpu.vector_store %arg7[%c4, %c0_53, %c0_54], %101 {strides = array<i32>} : memref<8x8x128xbf16, #tpu.memory_space<vmem>>, vector<1x8x128xbf16>,
    %cst_55 = arith.constant 0.000000e+00 : f32
    %102 = vector.broadcast %cst_55 : f32 to vector<8x128xf32>
    %103 = arith.select %94, %102, %88 : vector<8x128xi1>, vector<8x128xf32>
    %cst_56 = arith.constant 0.000000e+00 : f32
    %104 = vector.broadcast %cst_56 : f32 to vector<8x128xf32>
    %105 = arith.select %94, %104, %92 : vector<8x128xi1>, vector<8x128xf32>
    %c40 = arith.constant 40 : index
    %c0_57 = arith.constant 0 : index
    %106 = vector.load %arg8[%c40, %c0_57] : memref<64x128xf32, #tpu.memory_space<vmem>>, vector<8x128xf32>
    %107 = arith.mulf %105, %10 : vector<8x128xf32>
    %108 = arith.addf %107, %106 : vector<8x128xf32>
    %109 = arith.addf %108, %103 : vector<8x128xf32>
    %110 = arith.mulf %109, %13 : vector<8x128xf32>
    %cst_58 = arith.constant -1.000000e-01 : f32
    %111 = vector.broadcast %cst_58 : f32 to vector<8x128xf32>
    %112 = arith.cmpf olt, %110, %111 : vector<8x128xf32>
    %cst_59 = arith.constant 1.000000e+00 : f32
    %cst_60 = arith.constant 0.000000e+00 : f32
    %113 = vector.broadcast %cst_59 : f32 to vector<8x128xf32>
    %114 = vector.broadcast %cst_60 : f32 to vector<8x128xf32>
    %115 = arith.select %112, %113, %114 : vector<8x128xi1>, vector<8x128xf32>
    %116 = arith.truncf %115 : vector<8x128xf32> to vector<8x128xbf16>
    %c5 = arith.constant 5 : index
    %c0_61 = arith.constant 0 : index
    %c0_62 = arith.constant 0 : index
    %117 = vector.load %arg7[%c5, %c0_61, %c0_62] : memref<8x8x128xbf16, #tpu.memory_space<vmem>>, vector<1x8x128xbf16>
    %118 = vector.shape_cast %117 : vector<1x8x128xbf16> to vector<8x128xbf16>
    %119 = vector.shape_cast %116 : vector<8x128xbf16> to vector<1x8x128xbf16>
    tpu.vector_store %arg7[%c5, %c0_61, %c0_62], %119 {strides = array<i32>} : memref<8x8x128xbf16, #tpu.memory_space<vmem>>, vector<1x8x128xbf16>,
    %cst_63 = arith.constant 0.000000e+00 : f32
    %120 = vector.broadcast %cst_63 : f32 to vector<8x128xf32>
    %121 = arith.select %112, %120, %106 : vector<8x128xi1>, vector<8x128xf32>
    %cst_64 = arith.constant 0.000000e+00 : f32
    %122 = vector.broadcast %cst_64 : f32 to vector<8x128xf32>
    %123 = arith.select %112, %122, %110 : vector<8x128xi1>, vector<8x128xf32>
    %c48 = arith.constant 48 : index
    %c0_65 = arith.constant 0 : index
    %124 = vector.load %arg8[%c48, %c0_65] : memref<64x128xf32, #tpu.memory_space<vmem>>, vector<8x128xf32>
    %125 = arith.mulf %123, %10 : vector<8x128xf32>
    %126 = arith.addf %125, %124 : vector<8x128xf32>
    %127 = arith.addf %126, %121 : vector<8x128xf32>
    %128 = arith.mulf %127, %13 : vector<8x128xf32>
    %cst_66 = arith.constant -1.000000e-01 : f32
    %129 = vector.broadcast %cst_66 : f32 to vector<8x128xf32>
    %130 = arith.cmpf olt, %128, %129 : vector<8x128xf32>
    %cst_67 = arith.constant 1.000000e+00 : f32
    %cst_68 = arith.constant 0.000000e+00 : f32
    %131 = vector.broadcast %cst_67 : f32 to vector<8x128xf32>
    %132 = vector.broadcast %cst_68 : f32 to vector<8x128xf32>
    %133 = arith.select %130, %131, %132 : vector<8x128xi1>, vector<8x128xf32>
    %134 = arith.truncf %133 : vector<8x128xf32> to vector<8x128xbf16>
    %c6 = arith.constant 6 : index
    %c0_69 = arith.constant 0 : index
    %c0_70 = arith.constant 0 : index
    %135 = vector.load %arg7[%c6, %c0_69, %c0_70] : memref<8x8x128xbf16, #tpu.memory_space<vmem>>, vector<1x8x128xbf16>
    %136 = vector.shape_cast %135 : vector<1x8x128xbf16> to vector<8x128xbf16>
    %137 = vector.shape_cast %134 : vector<8x128xbf16> to vector<1x8x128xbf16>
    tpu.vector_store %arg7[%c6, %c0_69, %c0_70], %137 {strides = array<i32>} : memref<8x8x128xbf16, #tpu.memory_space<vmem>>, vector<1x8x128xbf16>,
    %cst_71 = arith.constant 0.000000e+00 : f32
    %138 = vector.broadcast %cst_71 : f32 to vector<8x128xf32>
    %139 = arith.select %130, %138, %124 : vector<8x128xi1>, vector<8x128xf32>
    %cst_72 = arith.constant 0.000000e+00 : f32
    %140 = vector.broadcast %cst_72 : f32 to vector<8x128xf32>
    %141 = arith.select %130, %140, %128 : vector<8x128xi1>, vector<8x128xf32>
    %c56 = arith.constant 56 : index
    %c0_73 = arith.constant 0 : index
    %142 = vector.load %arg8[%c56, %c0_73] : memref<64x128xf32, #tpu.memory_space<vmem>>, vector<8x128xf32>
    %143 = arith.mulf %141, %10 : vector<8x128xf32>
    %144 = arith.addf %143, %142 : vector<8x128xf32>
    %145 = arith.addf %144, %139 : vector<8x128xf32>
    %146 = arith.mulf %145, %13 : vector<8x128xf32>
    %cst_74 = arith.constant -1.000000e-01 : f32
    %147 = vector.broadcast %cst_74 : f32 to vector<8x128xf32>
    %148 = arith.cmpf olt, %146, %147 : vector<8x128xf32>
    %cst_75 = arith.constant 1.000000e+00 : f32
    %cst_76 = arith.constant 0.000000e+00 : f32
    %149 = vector.broadcast %cst_75 : f32 to vector<8x128xf32>
    %150 = vector.broadcast %cst_76 : f32 to vector<8x128xf32>
    %151 = arith.select %148, %149, %150 : vector<8x128xi1>, vector<8x128xf32>
    %152 = arith.truncf %151 : vector<8x128xf32> to vector<8x128xbf16>
    %c7 = arith.constant 7 : index
    %c0_77 = arith.constant 0 : index
    %c0_78 = arith.constant 0 : index
    %153 = vector.load %arg7[%c7, %c0_77, %c0_78] : memref<8x8x128xbf16, #tpu.memory_space<vmem>>, vector<1x8x128xbf16>
    %154 = vector.shape_cast %153 : vector<1x8x128xbf16> to vector<8x128xbf16>
    %155 = vector.shape_cast %152 : vector<8x128xbf16> to vector<1x8x128xbf16>
    tpu.vector_store %arg7[%c7, %c0_77, %c0_78], %155 {strides = array<i32>} : memref<8x8x128xbf16, #tpu.memory_space<vmem>>, vector<1x8x128xbf16>,
    %cst_79 = arith.constant 0.000000e+00 : f32
    %156 = vector.broadcast %cst_79 : f32 to vector<8x128xf32>
    %157 = arith.select %148, %156, %142 : vector<8x128xi1>, vector<8x128xf32>
    %cst_80 = arith.constant 0.000000e+00 : f32
    %158 = vector.broadcast %cst_80 : f32 to vector<8x128xf32>
    %159 = arith.select %148, %158, %146 : vector<8x128xi1>, vector<8x128xf32>
    %c0_81 = arith.constant 0 : index
    %c0_82 = arith.constant 0 : index
    %160 = vector.load %arg9[%c0_81, %c0_82] : memref<8x128xf32, #tpu.memory_space<vmem>>, vector<8x128xf32>
    tpu.vector_store %arg9[%c0_81, %c0_82], %157 {strides = array<i32>} : memref<8x128xf32, #tpu.memory_space<vmem>>, vector<8x128xf32>,
    %c0_83 = arith.constant 0 : index
    %c0_84 = arith.constant 0 : index
    %161 = vector.load %arg10[%c0_83, %c0_84] : memref<8x128xf32, #tpu.memory_space<vmem>>, vector<8x128xf32>
    tpu.vector_store %arg10[%c0_83, %c0_84], %159 {strides = array<i32>} : memref<8x128xf32, #tpu.memory_space<vmem>>, vector<8x128xf32>,
    return
  }
  func.func @transform_0(%arg0: i32, %arg1: i32, %arg2: i32) -> (i32, i32, i32) {
    %c0_i32 = arith.constant 0 : i32
    %c0_i32_0 = arith.constant 0 : i32
    return %arg2, %arg0, %c0_i32 : i32, i32, i32
  }
  func.func @transform_1(%arg0: i32, %arg1: i32, %arg2: i32) -> (i32, i32) {
    %c0_i32 = arith.constant 0 : i32
    %c0_i32_0 = arith.constant 0 : i32
    return %c0_i32, %arg1 : i32, i32
  }
  func.func @transform_2(%arg0: i32, %arg1: i32, %arg2: i32) -> (i32, i32) {
    %c0_i32 = arith.constant 0 : i32
    %c0_i32_0 = arith.constant 0 : i32
    return %c0_i32, %arg1 : i32, i32
  }
  func.func @transform_3(%arg0: i32, %arg1: i32, %arg2: i32) -> (i32, i32) {
    %c0_i32 = arith.constant 0 : i32
    %c0_i32_0 = arith.constant 0 : i32
    return %c0_i32, %arg1 : i32, i32
  }
  func.func @transform_4(%arg0: i32, %arg1: i32, %arg2: i32) -> (i32, i32, i32) {
    %c0_i32 = arith.constant 0 : i32
    return %arg2, %arg0, %arg1 : i32, i32, i32
  }
}

</mosaic_0001>

<llo_original>
// kernel: tpu_custom_call.1
$region0: #{tpu_custom_call.1}
  #allocation0 [shape = 'u32[]', space=smem, size = 0x4, offset = 0x4, fixed_abs, tag = 'smem constant byte address 0x4 - core index']
  #allocation1 [shape = 'u32[144,128]{1,0:T(1,128)}', space=vmem, size = 0x12000, scoped, tag = 'internal scratch']
  #allocation2 [shape = 'f32[64,128]{1,0:T(8,128)}', space=vmem, size = 0x8000, scoped, tag = 'scratch operand']
  #allocation3 [shape = 'f32[8,128]{1,0:T(8,128)}', space=vmem, size = 0x1000, scoped, tag = 'scratch operand']
  #allocation4 [shape = 'f32[8,128]{1,0:T(8,128)}', space=vmem, size = 0x1000, scoped, tag = 'scratch operand']
  %s0 = inlined_call_operand.hbm [shape: bf16[8,8,32], index: 0, kind: input, shape index: {}]
  %s1 = inlined_call_operand.hbm [shape: bf16[32,128], index: 1, kind: input, shape index: {}]
  %s2 = inlined_call_operand.vmem [shape: f32[1,128], index: 2, kind: input, shape index: {}]
  %s3 = inlined_call_operand.vmem [shape: f32[1,128], index: 3, kind: input, shape index: {}]
  %s4 = inlined_call_operand.hbm [shape: bf16[8,8,128], index: 4, kind: output, shape index: {}]
  %s5 = sld [smem:[#allocation0]]
  $region38: #{tpu_custom_call.1} parent=0
    _
  %s7 = ssub.s32 1, %s5
  %s8 = scalar_select 0, %s7, %s5
  $region1: #{tpu_custom_call.1} parent=0
    #allocation5 [shape = 'u8[16384]{0}', space=vmem, size = 0x4000, scoped, tag = 'input window, operand 0, single buffered']
    #allocation6 [shape = 's32[1]{0}', space=sflag, size = 0x4, scoped, tag = 'scoped memory for tpu_custom_call.1']
    #allocation7 [shape = 's32[1]{0}', space=sflag, size = 0x4, scoped, tag = 'scoped memory for tpu_custom_call.1']
    #allocation8 [shape = 'u8[8192]{0}', space=vmem, size = 0x2000, scoped, tag = 'input window, operand 1, single buffered']
    #allocation9 [shape = 's32[1]{0}', space=sflag, size = 0x4, scoped, tag = 'scoped memory for tpu_custom_call.1']
    #allocation10 [shape = 'u8[16384]{0}', space=vmem, size = 0x4000, scoped, tag = 'output window, operand 0, single buffered']
    %9 = vsyncpa [#allocation6], 0
    %10 = vsyncpa [#allocation9], 0
    %11 = vsyncpa [#allocation7], 0
    // Predicated region
    $region2: #{tpu_custom_call.1} parent=1 // pred_check
      _
    $region3: #{tpu_custom_call.1} parent=1 // pred_check_branch
      %13 = sbr.rel (0) target = $region5
    $region4: #{tpu_custom_call.1} parent=1 // pred_region
      %s15 = ssub.s32 512, 512
      %16 = vsyncadd [#allocation6], %s15
      %s17 = sshll.u32 [#allocation5], 4
      %s18 = int_to_ptr.vmem [resolvable:$true] %s17
      %23 = dma.hbm_to_vmem [thread:$0]  %s0, 512, %s18, [#allocation6], 64, 64, 4
    $region5: #{tpu_custom_call.1} parent=1 // pred_fallthru
      _
    // Predicated region
    $region6: #{tpu_custom_call.1} parent=1 // pred_check
      _
    $region7: #{tpu_custom_call.1} parent=1 // pred_check_branch
      %25 = sbr.rel (0) target = $region9
    $region8: #{tpu_custom_call.1} parent=1 // pred_region
      %s27 = ssub.s32 256, 256
      %28 = vsyncadd [#allocation9], %s27
      %s29 = sshll.u32 [#allocation8], 4
      %s30 = int_to_ptr.vmem [resolvable:$true] %s29
      %35 = dma.hbm_to_vmem [thread:$0]  %s1, 256, %s30, [#allocation9], 64, 64, 4
    $region9: #{tpu_custom_call.1} parent=1 // pred_fallthru
      _
    // Predicated region
    $region10: #{tpu_custom_call.1} parent=1 // pred_check
      _
    $region11: #{tpu_custom_call.1} parent=1 // pred_check_branch
      %37 = sbr.rel (0) target = $region13
    $region12: #{tpu_custom_call.1} parent=1 // pred_region
      _
    $region13: #{tpu_custom_call.1} parent=1 // pred_fallthru
      _
    // Predicated region
    $region14: #{tpu_custom_call.1} parent=1 // pred_check
      _
    $region15: #{tpu_custom_call.1} parent=1 // pred_check_branch
      %39 = sbr.rel (0) target = $region17
    $region16: #{tpu_custom_call.1} parent=1 // pred_region
      _
    $region17: #{tpu_custom_call.1} parent=1 // pred_fallthru
      _
    // Predicated region
    $region18: #{tpu_custom_call.1} parent=1 // pred_check
      _
    $region19: #{tpu_custom_call.1} parent=1 // pred_check_branch
      %41 = sbr.rel (0) target = $region21
    $region20: #{tpu_custom_call.1} parent=1 // pred_region
      %42 = dma.done [#allocation6], 512
    $region21: #{tpu_custom_call.1} parent=1 // pred_fallthru
      _
    // Predicated region
    $region22: #{tpu_custom_call.1} parent=1 // pred_check
      _
    $region23: #{tpu_custom_call.1} parent=1 // pred_check_branch
      %44 = sbr.rel (0) target = $region25
    $region24: #{tpu_custom_call.1} parent=1 // pred_region
      %45 = dma.done [#allocation9], 256
    $region25: #{tpu_custom_call.1} parent=1 // pred_fallthru
      _
    %p47 = scmp.eq.s32.totalorder 0, 0
    // Predicated region
    $region26: #{tpu_custom_call.1} parent=1 // pred_check
      %p48 = pneg %p47
    $region27: #{tpu_custom_call.1} parent=1 // pred_check_branch
      %50 = sbr.rel (%p48) target = $region29
    $region28: #{tpu_custom_call.1} parent=1 // pred_region
      %51 = vst [vmem:[#allocation3] sm:$0xff] 0.0
      %52 = vst [vmem:[#allocation4] sm:$0xff] 0.0
    $region29: #{tpu_custom_call.1} parent=1 // pred_fallthru
      _
    %v53 = vld [vmem:[#allocation5] sm:$0xf]
    %v54 = vld [vmem:[#allocation5 + $0x4] sm:$0xf]
    %v55 = vld [vmem:[#allocation5 + $0x8] sm:$0xf]
    %v56 = vld [vmem:[#allocation5 + $0xc] sm:$0xf]
    %v57 = vld [vmem:[#allocation5 + $0x10] sm:$0xf]
    %v58 = vld [vmem:[#allocation5 + $0x14] sm:$0xf]
    %v59 = vld [vmem:[#allocation5 + $0x18] sm:$0xf]
    %v60 = vld [vmem:[#allocation5 + $0x1c] sm:$0xf]
    %v61 = vld [vmem:[#allocation8] sm:$0xf]
    %v62 = vld [vmem:[#allocation8 + $0x4] sm:$0xf]
    %v63 = vld [vmem:[#allocation8 + $0x8] sm:$0xf]
    %v64 = vld [vmem:[#allocation8 + $0xc] sm:$0xf]
    %v73 = vunpack.c.l.b16 %v53
    %v74 = vunpack.c.l.b16 %v54
    %v75 = vunpack.c.l.b16 %v55
    %v76 = vunpack.c.l.b16 %v56
    %v77 = vunpack.c.l.b16 %v57
    %v78 = vunpack.c.l.b16 %v58
    %v79 = vunpack.c.l.b16 %v59
    %v80 = vunpack.c.l.b16 %v60
    %v81 = vpack.c.b16 %v74, %v73
    %v82 = vpack.c.b16 %v76, %v75
    %v83 = vpack.c.b16 %v78, %v77
    %v84 = vpack.c.b16 %v80, %v79
    %v89 = vunpack.c.l.b16 %v61
    %v90 = vunpack.c.l.b16 %v62
    %v91 = vunpack.c.l.b16 %v63
    %v92 = vunpack.c.l.b16 %v64
    %v93 = vpack.c.b16 %v90, %v89
    %v94 = vpack.c.b16 %v92, %v91
    %vm97 = vcmask 261120
    %v99 = vsel %vm97, %v81, 0
    %v102 = vsel %vm97, %v82, 0
    %v105 = vsel %vm97, %v83, 0
    %v108 = vsel %vm97, %v84, 0
    %110 = vmatprep.subr.bf16.mxu0 0
    %111 = vmatpush1.bf16.msra.mxu0 %v93
    %112 = vmatprep.subr.bf16.mxu0 0
    %113 = vmatpush1.bf16.msra.mxu0 %v94
    %114 = vmatprep.subr.bf16.mxu0 0
    %115 = vmatpush1.bf16.msra.mxu0 0
    %116 = vmatprep.subr.bf16.mxu0 0
    %117 = vmatpush1.bf16.msra.mxu0 0
    %118 = vmatprep.subr.bf16.mxu0 0
    %119 = vmatpush1.bf16.msra.mxu0 0
    %120 = vmatprep.subr.bf16.mxu0 0
    %121 = vmatpush1.bf16.msra.mxu0 0
    %122 = vmatprep.subr.bf16.mxu0 0
    %123 = vmatpush1.bf16.msra.mxu0 0
    %124 = vmatprep.subr.bf16.mxu0 0
    %125 = vmatpush1.bf16.msra.mxu0 0
    %126 = vmatprep.subr.bf16.mxu0 0
    %127 = vmatpush1.bf16.msra.mxu0 0
    %128 = vmatprep.subr.bf16.mxu0 0
    %129 = vmatpush1.bf16.msra.mxu0 0
    %130 = vmatprep.subr.bf16.mxu0 0
    %131 = vmatpush1.bf16.msra.mxu0 0
    %132 = vmatprep.subr.bf16.mxu0 0
    %133 = vmatpush1.bf16.msra.mxu0 0
    %134 = vmatprep.subr.bf16.mxu0 0
    %135 = vmatpush1.bf16.msra.mxu0 0
    %136 = vmatprep.subr.bf16.mxu0 0
    %137 = vmatpush1.bf16.msra.mxu0 0
    %138 = vmatprep.subr.bf16.mxu0 0
    %139 = vmatpush1.bf16.msra.mxu0 0
    %140 = vmatprep.subr.bf16.mxu0 0
    %141 = vmatpush1.bf16.msra.mxu0 0
    %142 = vmatprep.mubr.bf16.mxu0 0
    %143 = vmatmul.mubr.bf16.gmra.mrb[0].mxu0 %v99
    %v144 = vpop.f32.mrb[0].mxu0
    %v145 = vadd.f32 0.0, %v144
    %v146 = vpop.f32.mrb[0].mxu0
    %v147 = vpop.f32.mrb[0].mxu0
    %v148 = vadd.f32 0.0, %v147
    %v149 = vpop.f32.mrb[0].mxu0
    %150 = vmatprep.mubr.bf16.mxu0 0
    %151 = vmatmul.mubr.bf16.gmra.mrb[0].mxu0 %v102
    %v152 = vpop.f32.mrb[0].mxu0
    %v153 = vadd.f32 0.0, %v152
    %v154 = vpop.f32.mrb[0].mxu0
    %v155 = vpop.f32.mrb[0].mxu0
    %v156 = vadd.f32 0.0, %v155
    %v157 = vpop.f32.mrb[0].mxu0
    %158 = vmatprep.mubr.bf16.mxu0 0
    %159 = vmatmul.mubr.bf16.gmra.mrb[0].mxu0 %v105
    %v160 = vpop.f32.mrb[0].mxu0
    %v161 = vadd.f32 0.0, %v160
    %v162 = vpop.f32.mrb[0].mxu0
    %v163 = vpop.f32.mrb[0].mxu0
    %v164 = vadd.f32 0.0, %v163
    %v165 = vpop.f32.mrb[0].mxu0
    %166 = vmatprep.mubr.bf16.mxu0 0
    %167 = vmatmul.mubr.bf16.gmra.mrb[0].mxu0 %v108
    %v168 = vpop.f32.mrb[0].mxu0
    %v169 = vadd.f32 0.0, %v168
    %v170 = vpop.f32.mrb[0].mxu0
    %v171 = vpop.f32.mrb[0].mxu0
    %v172 = vadd.f32 0.0, %v171
    %v173 = vpop.f32.mrb[0].mxu0
    %174 = vdwg.mxu0
    %175 = vst [vmem:[#allocation2] sm:$0xff] %v145
    %176 = vst [vmem:[#allocation2 + $0x8] sm:$0xff] %v148
    %177 = vst [vmem:[#allocation2 + $0x10] sm:$0xff] %v153
    %178 = vst [vmem:[#allocation2 + $0x18] sm:$0xff] %v156
    %179 = vst [vmem:[#allocation2 + $0x20] sm:$0xff] %v161
    %180 = vst [vmem:[#allocation2 + $0x28] sm:$0xff] %v164
    %181 = vst [vmem:[#allocation2 + $0x30] sm:$0xff] %v169
    %182 = vst [vmem:[#allocation2 + $0x38] sm:$0xff] %v172
    %v183 = vld [vmem:[%s2] sm:$0x1]
    %v185 = vlaneseq
    %v186 = vshrl.u32 %v185, 7
    %v187 = vsub.s32 0, %v186
    %v188 = vrot.slane %v183, %v187
    %v190 = vld [vmem:[%s3] sm:$0x1]
    %v192 = vlaneseq
    %v193 = vshrl.u32 %v192, 7
    %v194 = vsub.s32 0, %v193
    %v195 = vrot.slane %v190, %v194
    %v197 = vld [vmem:[#allocation3] sm:$0xff]
    %v198 = vld [vmem:[#allocation4] sm:$0xff]
    %v199 = vld [vmem:[#allocation2] sm:$0xff]
    %v200 = vmul.f32 %v198, %v188
    %v201 = vadd.f32 %v200, %v199
    %v202 = vadd.f32 %v201, %v197
    %v203 = vmul.f32 %v202, %v195
    %vm204 = vcmp.lt.f32.partialorder %v203, -0.1
    %v205 = vsel %vm204, 1.0, 0.0
    %v206 = vpack.c.bf16 %v205, %v205
    %207 = vst [vmem:[#allocation10] sm:$0xf] %v206
    %v208 = vsel %vm204, 0.0, %v199
    %v209 = vsel %vm204, 0.0, %v203
    %v210 = vld [vmem:[#allocation2 + $0x8] sm:$0xff]
    %v211 = vmul.f32 %v209, %v188
    %v212 = vadd.f32 %v211, %v210
    %v213 = vadd.f32 %v212, %v208
    %v214 = vmul.f32 %v213, %v195
    %vm215 = vcmp.lt.f32.partialorder %v214, -0.1
    %v216 = vsel %vm215, 1.0, 0.0
    %v217 = vpack.c.bf16 %v216, %v216
    %s218 = scalar_lea.vmem [#allocation10], 4
    %219 = vst [vmem:[%s218] sm:$0xf] %v217
    %v220 = vsel %vm215, 0.0, %v210
    %v221 = vsel %vm215, 0.0, %v214
    %v222 = vld [vmem:[#allocation2 + $0x10] sm:$0xff]
    %v223 = vmul.f32 %v221, %v188
    %v224 = vadd.f32 %v223, %v222
    %v225 = vadd.f32 %v224, %v220
    %v226 = vmul.f32 %v225, %v195
    %vm227 = vcmp.lt.f32.partialorder %v226, -0.1
    %v228 = vsel %vm227, 1.0, 0.0
    %v229 = vpack.c.bf16 %v228, %v228
    %s230 = scalar_lea.vmem [#allocation10], 8
    %231 = vst [vmem:[%s230] sm:$0xf] %v229
    %v232 = vsel %vm227, 0.0, %v222
    %v233 = vsel %vm227, 0.0, %v226
    %v234 = vld [vmem:[#allocation2 + $0x18] sm:$0xff]
    %v235 = vmul.f32 %v233, %v188
    %v236 = vadd.f32 %v235, %v234
    %v237 = vadd.f32 %v236, %v232
    %v238 = vmul.f32 %v237, %v195
    %vm239 = vcmp.lt.f32.partialorder %v238, -0.1
    %v240 = vsel %vm239, 1.0, 0.0
    %v241 = vpack.c.bf16 %v240, %v240
    %s242 = scalar_lea.vmem [#allocation10], 12
    %243 = vst [vmem:[%s242] sm:$0xf] %v241
    %v244 = vsel %vm239, 0.0, %v234
    %v245 = vsel %vm239, 0.0, %v238
    %v246 = vld [vmem:[#allocation2 + $0x20] sm:$0xff]
    %v247 = vmul.f32 %v245, %v188
    %v248 = vadd.f32 %v247, %v246
    %v249 = vadd.f32 %v248, %v244
    %v250 = vmul.f32 %v249, %v195
    %vm251 = vcmp.lt.f32.partialorder %v250, -0.1
    %v252 = vsel %vm251, 1.0, 0.0
    %v253 = vpack.c.bf16 %v252, %v252
    %s254 = scalar_lea.vmem [#allocation10], 16
    %255 = vst [vmem:[%s254] sm:$0xf] %v253
    %v256 = vsel %vm251, 0.0, %v246
    %v257 = vsel %vm251, 0.0, %v250
    %v258 = vld [vmem:[#allocation2 + $0x28] sm:$0xff]
    %v259 = vmul.f32 %v257, %v188
    %v260 = vadd.f32 %v259, %v258
    %v261 = vadd.f32 %v260, %v256
    %v262 = vmul.f32 %v261, %v195
    %vm263 = vcmp.lt.f32.partialorder %v262, -0.1
    %v264 = vsel %vm263, 1.0, 0.0
    %v265 = vpack.c.bf16 %v264, %v264
    %s266 = scalar_lea.vmem [#allocation10], 20
    %267 = vst [vmem:[%s266] sm:$0xf] %v265
    %v268 = vsel %vm263, 0.0, %v258
    %v269 = vsel %vm263, 0.0, %v262
    %v270 = vld [vmem:[#allocation2 + $0x30] sm:$0xff]
    %v271 = vmul.f32 %v269, %v188
    %v272 = vadd.f32 %v271, %v270
    %v273 = vadd.f32 %v272, %v268
    %v274 = vmul.f32 %v273, %v195
    %vm275 = vcmp.lt.f32.partialorder %v274, -0.1
    %v276 = vsel %vm275, 1.0, 0.0
    %v277 = vpack.c.bf16 %v276, %v276
    %s278 = scalar_lea.vmem [#allocation10], 24
    %279 = vst [vmem:[%s278] sm:$0xf] %v277
    %v280 = vsel %vm275, 0.0, %v270
    %v281 = vsel %vm275, 0.0, %v274
    %v282 = vld [vmem:[#allocation2 + $0x38] sm:$0xff]
    %v283 = vmul.f32 %v281, %v188
    %v284 = vadd.f32 %v283, %v282
    %v285 = vadd.f32 %v284, %v280
    %v286 = vmul.f32 %v285, %v195
    %vm287 = vcmp.lt.f32.partialorder %v286, -0.1
    %v288 = vsel %vm287, 1.0, 0.0
    %v289 = vpack.c.bf16 %v288, %v288
    %s290 = scalar_lea.vmem [#allocation10], 28
    %291 = vst [vmem:[%s290] sm:$0xf] %v289
    %v292 = vsel %vm287, 0.0, %v282
    %v293 = vsel %vm287, 0.0, %v286
    %294 = vst [vmem:[#allocation3] sm:$0xff] %v292
    %295 = vst [vmem:[#allocation4] sm:$0xff] %v293
    // Predicated region
    $region30: #{tpu_custom_call.1} parent=1 // pred_check
      _
    $region31: #{tpu_custom_call.1} parent=1 // pred_check_branch
      %297 = sbr.rel (0) target = $region33
    $region32: #{tpu_custom_call.1} parent=1 // pred_region
      %s299 = ssub.s32 512, 512
      %300 = vsyncadd [#allocation7], %s299
      %s301 = sshll.u32 [#allocation10], 4
      %s302 = int_to_ptr.vmem [resolvable:$true] %s301
      %307 = dma.vmem_to_hbm [thread:$0]  %s302, 512, %s4, [#allocation7], 64, 64, 4
    $region33: #{tpu_custom_call.1} parent=1 // pred_fallthru
      _
    // Predicated region
    $region34: #{tpu_custom_call.1} parent=1 // pred_check
      _
    $region35: #{tpu_custom_call.1} parent=1 // pred_check_branch
      %309 = sbr.rel (0) target = $region37
    $region36: #{tpu_custom_call.1} parent=1 // pred_region
      %310 = dma.done [#allocation7], 512
    $region37: #{tpu_custom_call.1} parent=1 // pred_fallthru
      _
    %311 = vsyncpa [#allocation6], 1
    %312 = vsyncpa [#allocation9], 1
    %313 = vsyncpa [#allocation7], 1

</llo_original>
